<compile_context>
chip_gen: v7x
topology: tpu7x:2x2x1
jax: 0.10.0
libtpu: 0.0.40
codegen_flags: <defaults>
</compile_context>

<pallas_src>
import functools

import jax
import jax.numpy as jnp
import numpy as np
from jax import lax
from jax.experimental import pallas as pl
from jax.experimental.pallas import tpu as pltpu

LANES = 128
EPS = 1e-5


def _round_up(x, m):
    return (x + m - 1) // m * m


def _pick_tile_rows(hw, max_rows=512):
    """Largest power-of-two-reduced divisor of H*W that is <= max_rows.

    Keeps tiles aligned to samples so per-sample accumulators can be indexed
    directly from the grid index.
    """
    tm = hw
    while tm > max_rows and tm % 2 == 0:
        tm //= 2
    return tm


# ----------------- Pass 1: conv1 + global per-channel sum / sumsq ------------
def _conv_stats_kernel(x_ref, w_ref, sum_ref, sq_ref):
    @pl.when(pl.program_id(0) == 0)
    def _():
        sum_ref[...] = jnp.zeros_like(sum_ref)
        sq_ref[...] = jnp.zeros_like(sq_ref)

    z = jnp.dot(x_ref[...], w_ref[...], preferred_element_type=jnp.float32)
    sum_ref[...] += jnp.sum(z, axis=0, keepdims=True)
    sq_ref[...] += jnp.sum(z * z, axis=0, keepdims=True)


# ------- Pass 2: normalize + ReLU, accumulate per-sample sums of feat --------
def _feat_psum_kernel(x_ref, w_ref, scale_ref, shift_ref, psum_ref, *,
                      tiles_per_sample):
    @pl.when(pl.program_id(0) % tiles_per_sample == 0)
    def _():
        psum_ref[...] = jnp.zeros_like(psum_ref)

    z = jnp.dot(x_ref[...], w_ref[...], preferred_element_type=jnp.float32)
    feat = jnp.maximum(z * scale_ref[...] + shift_ref[...], 0.0)
    psum_ref[...] += jnp.sum(feat, axis=0, keepdims=True)[None]


# --------------------- Pass 3: attention branch (tiny) -----------------------
def _atten_kernel(psum_ref, w2_ref, gamma_ref, beta_ref, factor_ref, *,
                  inv_hw, eps):
    # per-sample spatial mean of feat: (N, Cq)
    m = psum_ref[...][:, 0, :] * inv_hw
    # 1x1 conv Cout->Cout (f32, tiny)
    a = jnp.dot(m, w2_ref[...], preferred_element_type=jnp.float32)
    # BN2 in train mode: batch statistics over the N samples
    mu = jnp.mean(a, axis=0, keepdims=True)
    var = jnp.mean((a - mu) ** 2, axis=0, keepdims=True)
    an = (a - mu) * lax.rsqrt(var + eps) * gamma_ref[...] + beta_ref[...]
    # feat*sigmoid + feat == feat * (1 + sigmoid)
    factor_ref[...] = (1.0 + jax.nn.sigmoid(an))[:, None, :]


# ------------------ Pass 4: out = feat * (1 + atten[sample]) -----------------
def _output_kernel(x_ref, w_ref, scale_ref, shift_ref, factor_ref, o_ref):
    z = jnp.dot(x_ref[...], w_ref[...], preferred_element_type=jnp.float32)
    feat = jnp.maximum(z * scale_ref[...] + shift_ref[...], 0.0)
    o_ref[...] = feat * factor_ref[...][0]


def feature_fusion_forward(fsp, fcp, w1, gamma1, beta1, w2, gamma2, beta2, *,
                           eps=EPS):
    """NCHW in / NCHW out, matching FeatureFusionModule.forward (train mode)."""
    N, c1, H, W = fsp.shape
    c2 = fcp.shape[1]
    Cin = c1 + c2
    Cout = w1.shape[0]
    assert w1.shape == (Cout, Cin, 1, 1) and w2.shape == (Cout, Cout, 1, 1)

    HW = H * W
    M = N * HW
    Cp = _round_up(Cin, LANES)          # lane-padded input channels
    Cq = _round_up(Cout, LANES)         # lane-padded output channels
    TM = _pick_tile_rows(HW)            # output rows per grid step
    assert HW % TM == 0 and TM % 8 == 0, (HW, TM)
    tiles_per_sample = HW // TM
    num_tiles = N * tiles_per_sample

    # --- glue: NCHW -> lane-dense (M, Cp) bf16 slab (padded once, reused) ----
    fcat = jnp.concatenate(
        [jnp.transpose(fsp, (0, 2, 3, 1)), jnp.transpose(fcp, (0, 2, 3, 1))],
        axis=-1)
    x = jnp.pad(fcat.astype(jnp.bfloat16),
                ((0, 0), (0, 0), (0, 0), (0, Cp - Cin))).reshape(M, Cp)

    # Conv1 weight (Cout, Cin, 1, 1) -> lane-padded (Cp, Cq) bf16 matrix.
    w1_mat = jnp.pad(jnp.transpose(w1[:, :, 0, 0]).astype(jnp.bfloat16),
                     ((0, Cp - Cin), (0, Cq - Cout)))
    g1 = jnp.pad(gamma1.astype(jnp.float32), (0, Cq - Cout)).reshape(1, Cq)
    b1 = jnp.pad(beta1.astype(jnp.float32), (0, Cq - Cout)).reshape(1, Cq)

    x_spec = pl.BlockSpec((TM, Cp), lambda i: (i, 0))
    w_spec = pl.BlockSpec((Cp, Cq), lambda i: (0, 0))       # resident weights
    vec_spec = pl.BlockSpec((1, Cq), lambda i: (0, 0))       # per-channel vecs
    samp_spec = pl.BlockSpec((1, 1, Cq),
                             lambda i: (i // tiles_per_sample, 0, 0))
    out_spec = pl.BlockSpec((TM, Cq), lambda i: (i, 0))

    # ----------- pass 1: conv + global per-channel sum / sum-of-squares ------
    s1, sq1 = pl.pallas_call(
        _conv_stats_kernel,
        out_shape=(jax.ShapeDtypeStruct((1, Cq), jnp.float32),
                   jax.ShapeDtypeStruct((1, Cq), jnp.float32)),
        grid_spec=pltpu.PrefetchScalarGridSpec(
            num_scalar_prefetch=0, grid=(num_tiles,),
            in_specs=[x_spec, w_spec],
            out_specs=[vec_spec, vec_spec]),
        compiler_params=pltpu.CompilerParams(
            dimension_semantics=("arbitrary",)),
    )(x, w1_mat)

    # Fold train-mode BN1 (batch mean / biased var) into a scale & shift (tiny
    # (1, Cq) glue ops; f32 throughout to avoid cancellation for large M).
    mean1 = s1 / M
    var1 = jnp.maximum(sq1 / M - mean1 * mean1, 0.0)
    scale1 = g1 * lax.rsqrt(var1 + eps)
    shift1 = b1 - mean1 * scale1

    # -------- pass 2: per-sample spatial sums of feat (attention mean) -------
    psum = pl.pallas_call(
        functools.partial(_feat_psum_kernel,
                          tiles_per_sample=tiles_per_sample),
        out_shape=jax.ShapeDtypeStruct((N, 1, Cq), jnp.float32),
        grid_spec=pltpu.PrefetchScalarGridSpec(
            num_scalar_prefetch=0, grid=(num_tiles,),
            in_specs=[x_spec, w_spec, vec_spec, vec_spec],
            out_specs=samp_spec),
        compiler_params=pltpu.CompilerParams(
            dimension_semantics=("arbitrary",)),
    )(x, w1_mat, scale1, shift1)

    # --------------------------- pass 3: attention ---------------------------
    w2_mat = jnp.pad(jnp.transpose(w2[:, :, 0, 0]).astype(jnp.float32),
                     ((0, Cq - Cout), (0, Cq - Cout)))
    g2 = jnp.pad(gamma2.astype(jnp.float32), (0, Cq - Cout)).reshape(1, Cq)
    b2 = jnp.pad(beta2.astype(jnp.float32), (0, Cq - Cout)).reshape(1, Cq)
    vmem = pl.BlockSpec(memory_space=pltpu.MemorySpace.VMEM)
    factor = pl.pallas_call(
        functools.partial(_atten_kernel, inv_hw=1.0 / HW, eps=eps),
        out_shape=jax.ShapeDtypeStruct((N, 1, Cq), jnp.float32),
        in_specs=[vmem, vmem, vmem, vmem],
        out_specs=vmem,
    )(psum, w2_mat, g2, b2)

    # --------------- pass 4: out = feat * (1 + atten[sample]) ----------------
    out_flat = pl.pallas_call(
        _output_kernel,
        out_shape=jax.ShapeDtypeStruct((M, Cq), jnp.float32),
        grid_spec=pltpu.PrefetchScalarGridSpec(
            num_scalar_prefetch=0, grid=(num_tiles,),
            in_specs=[x_spec, w_spec, vec_spec, vec_spec, samp_spec],
            out_specs=out_spec),
        compiler_params=pltpu.CompilerParams(
            dimension_semantics=("parallel",)),
    )(x, w1_mat, scale1, shift1, factor)

    # glue: strip channel padding, back to NCHW
    out = out_flat[:, :Cout].reshape(N, H, W, Cout)
    return jnp.transpose(out, (0, 3, 1, 2))


def reference(fsp, fcp, w1, gamma1, beta1, w2, gamma2, beta2, eps=EPS):
    """Pure-JAX mirror of the PyTorch forward (train-mode BN).

    Conv1 operands are quantized to bf16 (the kernel's deliberate storage
    dtype, f32 accumulate) so the check isolates kernel-structure errors from
    the intended precision choice.
    """
    fcat = jnp.concatenate([fsp, fcp], axis=1)
    xq = fcat.astype(jnp.bfloat16).astype(jnp.float32)
    wq = w1.astype(jnp.bfloat16).astype(jnp.float32)
    z = lax.conv_general_dilated(xq, wq, (1, 1), "VALID",
                                 dimension_numbers=("NCHW", "OIHW", "NCHW"))
    mean = z.mean(axis=(0, 2, 3), keepdims=True)
    var = ((z - mean) ** 2).mean(axis=(0, 2, 3), keepdims=True)
    feat = (z - mean) * lax.rsqrt(var + eps)
    feat = feat * gamma1.reshape(1, -1, 1, 1) + beta1.reshape(1, -1, 1, 1)
    feat = jnp.maximum(feat, 0.0)

    atten = feat.mean(axis=(2, 3), keepdims=True)
    atten = lax.conv_general_dilated(atten, w2, (1, 1), "VALID",
                                     dimension_numbers=("NCHW", "OIHW", "NCHW"))
    amean = atten.mean(axis=(0, 2, 3), keepdims=True)
    avar = ((atten - amean) ** 2).mean(axis=(0, 2, 3), keepdims=True)
    atten = (atten - amean) * lax.rsqrt(avar + eps)
    atten = atten * gamma2.reshape(1, -1, 1, 1) + beta2.reshape(1, -1, 1, 1)
    atten = jax.nn.sigmoid(atten)
    return feat * atten + feat


if __name__ == "__main__":
    # Small shapes consistent with the module: fsp/fcp each 4 channels,
    # in_chan = 8, out_chan = 16, 16x16 feature maps, batch 2.
    N, Csp, Ccp, H, W = 2, 4, 4, 16, 16
    in_chan, out_chan = Csp + Ccp, 16

    key = jax.random.PRNGKey(0)
    k1, k2, k3, k4 = jax.random.split(key, 4)
    fsp = jax.random.normal(k1, (N, Csp, H, W), dtype=jnp.float32)
    fcp = jax.random.normal(k2, (N, Ccp, H, W), dtype=jnp.float32)

    # init_weight(): kaiming_normal_(a=1) -> std = sqrt(2/(1+1))/sqrt(fan_in)
    w1 = jax.random.normal(k3, (out_chan, in_chan, 1, 1), jnp.float32) / np.sqrt(in_chan)
    w2 = jax.random.normal(k4, (out_chan, out_chan, 1, 1), jnp.float32) / np.sqrt(out_chan)
    gamma1 = jnp.ones((out_chan,), jnp.float32)   # BatchNorm2d default weight
    beta1 = jnp.zeros((out_chan,), jnp.float32)   # BatchNorm2d default bias
    gamma2 = jnp.ones((out_chan,), jnp.float32)
    beta2 = jnp.zeros((out_chan,), jnp.float32)

    out = feature_fusion_forward(fsp, fcp, w1, gamma1, beta1, w2, gamma2, beta2)
    out = jax.block_until_ready(out)

    ref = jax.block_until_ready(
        reference(fsp, fcp, w1, gamma1, beta1, w2, gamma2, beta2))
    assert out.shape == (N, out_chan, H, W), out.shape
    np.testing.assert_allclose(np.asarray(out), np.asarray(ref),
                               rtol=1e-3, atol=1e-3)
    print("KERNEL_OK")
</pallas_src>

<mosaic_0001>
module attributes {stable_mosaic.version = 11 : i64} {
  func.func @_conv_stats_kernel(%arg0: i32, %arg1: memref<256x128xbf16, #tpu.memory_space<vmem>>, %arg2: memref<128x128xbf16, #tpu.memory_space<vmem>>, %arg3: memref<1x128xf32, #tpu.memory_space<vmem>>, %arg4: memref<1x128xf32, #tpu.memory_space<vmem>>) attributes {dimension_semantics = [#tpu.dimension_semantics<arbitrary>], iteration_bounds = array<i64: 2>, scalar_prefetch = 0 : i64, scratch_operands = 0 : i64, tpu.core_type = #tpu.core_type<tc>, window_params = [{transform_indices = @transform_0, window_bounds = array<i64: 256, 128>}, {pipeline_mode = #tpu.pipeline_mode<synchronous>, transform_indices = @transform_1, window_bounds = array<i64: 128, 128>}, {pipeline_mode = #tpu.pipeline_mode<synchronous>, transform_indices = @transform_2, window_bounds = array<i64: 1, 128>}, {pipeline_mode = #tpu.pipeline_mode<synchronous>, transform_indices = @transform_3, window_bounds = array<i64: 1, 128>}]} {
    %c0_i32 = arith.constant 0 : i32
    %0 = arith.cmpi eq, %arg0, %c0_i32 : i32
    %1 = arith.extui %0 : i1 to i32
    %c0_i32_0 = arith.constant 0 : i32
    %2 = arith.cmpi ne, %1, %c0_i32_0 : i32
    scf.if %2 {
      %cst_14 = arith.constant 0.000000e+00 : f32
      %17 = vector.broadcast %cst_14 : f32 to vector<1x128xf32>
      %c0_15 = arith.constant 0 : index
      %c0_16 = arith.constant 0 : index
      %18 = vector.load %arg3[%c0_15, %c0_16] : memref<1x128xf32, #tpu.memory_space<vmem>>, vector<1x128xf32>
      tpu.vector_store %arg3[%c0_15, %c0_16], %17 {strides = array<i32>} : memref<1x128xf32, #tpu.memory_space<vmem>>, vector<1x128xf32>,
      %cst_17 = arith.constant 0.000000e+00 : f32
      %19 = vector.broadcast %cst_17 : f32 to vector<1x128xf32>
      %c0_18 = arith.constant 0 : index
      %c0_19 = arith.constant 0 : index
      %20 = vector.load %arg4[%c0_18, %c0_19] : memref<1x128xf32, #tpu.memory_space<vmem>>, vector<1x128xf32>
      tpu.vector_store %arg4[%c0_18, %c0_19], %19 {strides = array<i32>} : memref<1x128xf32, #tpu.memory_space<vmem>>, vector<1x128xf32>,
    } else {
    }
    %c0 = arith.constant 0 : index
    %c0_1 = arith.constant 0 : index
    %3 = vector.load %arg1[%c0, %c0_1] : memref<256x128xbf16, #tpu.memory_space<vmem>>, vector<256x128xbf16>
    %c0_2 = arith.constant 0 : index
    %c0_3 = arith.constant 0 : index
    %4 = vector.load %arg2[%c0_2, %c0_3] : memref<128x128xbf16, #tpu.memory_space<vmem>>, vector<128x128xbf16>
    %cst = arith.constant dense<0.000000e+00> : vector<256x128xf32>
    %5 = tpu.matmul %3, %4, %cst {dimension_numbers = #tpu.dot_dimension_numbers<[1], [0], [0], [1], [0, 0, 1, 1], [], []>} : vector<256x128xbf16>, vector<128x128xbf16>, vector<256x128xf32> -> vector<256x128xf32>
    %c0_4 = arith.constant 0 : index
    %c0_5 = arith.constant 0 : index
    %6 = vector.load %arg3[%c0_4, %c0_5] : memref<1x128xf32, #tpu.memory_space<vmem>>, vector<1x128xf32>
    %cst_6 = arith.constant dense<0.000000e+00> : vector<128xf32>
    %7 = vector.multi_reduction <add>, %5, %cst_6 [0] : vector<256x128xf32> to vector<128xf32>
    %8 = vector.shape_cast %7 : vector<128xf32> to vector<1x128xf32>
    %9 = arith.addf %6, %8 : vector<1x128xf32>
    %c0_7 = arith.constant 0 : index
    %c0_8 = arith.constant 0 : index
    %10 = vector.load %arg3[%c0_7, %c0_8] : memref<1x128xf32, #tpu.memory_space<vmem>>, vector<1x128xf32>
    tpu.vector_store %arg3[%c0_7, %c0_8], %9 {strides = array<i32>} : memref<1x128xf32, #tpu.memory_space<vmem>>, vector<1x128xf32>,
    %c0_9 = arith.constant 0 : index
    %c0_10 = arith.constant 0 : index
    %11 = vector.load %arg4[%c0_9, %c0_10] : memref<1x128xf32, #tpu.memory_space<vmem>>, vector<1x128xf32>
    %12 = arith.mulf %5, %5 : vector<256x128xf32>
    %cst_11 = arith.constant dense<0.000000e+00> : vector<128xf32>
    %13 = vector.multi_reduction <add>, %12, %cst_11 [0] : vector<256x128xf32> to vector<128xf32>
    %14 = vector.shape_cast %13 : vector<128xf32> to vector<1x128xf32>
    %15 = arith.addf %11, %14 : vector<1x128xf32>
    %c0_12 = arith.constant 0 : index
    %c0_13 = arith.constant 0 : index
    %16 = vector.load %arg4[%c0_12, %c0_13] : memref<1x128xf32, #tpu.memory_space<vmem>>, vector<1x128xf32>
    tpu.vector_store %arg4[%c0_12, %c0_13], %15 {strides = array<i32>} : memref<1x128xf32, #tpu.memory_space<vmem>>, vector<1x128xf32>,
    return
  }
  func.func @transform_0(%arg0: i32) -> (i32, i32) {
    %c0_i32 = arith.constant 0 : i32
    %c0_i32_0 = arith.constant 0 : i32
    return %arg0, %c0_i32 : i32, i32
  }
  func.func @transform_1(%arg0: i32) -> (i32, i32) {
    %c0_i32 = arith.constant 0 : i32
    %c0_i32_0 = arith.constant 0 : i32
    %c0_i32_1 = arith.constant 0 : i32
    return %c0_i32, %c0_i32_0 : i32, i32
  }
  func.func @transform_2(%arg0: i32) -> (i32, i32) {
    %c0_i32 = arith.constant 0 : i32
    %c0_i32_0 = arith.constant 0 : i32
    %c0_i32_1 = arith.constant 0 : i32
    return %c0_i32, %c0_i32_0 : i32, i32
  }
  func.func @transform_3(%arg0: i32) -> (i32, i32) {
    %c0_i32 = arith.constant 0 : i32
    %c0_i32_0 = arith.constant 0 : i32
    %c0_i32_1 = arith.constant 0 : i32
    return %c0_i32, %c0_i32_0 : i32, i32
  }
}

</mosaic_0001>

<llo_original>
// kernel: tpu_custom_call.1
$region0: #{tpu_custom_call.1}
  #allocation0 [shape = 'u32[]', space=smem, size = 0x4, offset = 0x4, fixed_abs, tag = 'smem constant byte address 0x4 - core index']
  #allocation1 [shape = 'u32[144,128]{1,0:T(1,128)}', space=vmem, size = 0x12000, scoped, tag = 'internal scratch']
  %s0 = inlined_call_operand.hbm [shape: bf16[512,128], index: 0, kind: input, shape index: {}]
  %s1 = inlined_call_operand.hbm [shape: bf16[128,128], index: 1, kind: input, shape index: {}]
  %s2 = inlined_call_operand.hbm [shape: f32[1,128], index: 2, kind: output, shape index: {0}]
  %s3 = inlined_call_operand.hbm [shape: f32[1,128], index: 3, kind: output, shape index: {1}]
  %4 = xla_tuple %s2, %s3
  %s5 = sld [smem:[#allocation0]]
  $region61: #{tpu_custom_call.1} parent=0
    _
  %s7 = ssub.s32 1, %s5
  %s8 = scalar_select 0, %s7, %s5
  $region1: #{tpu_custom_call.1} parent=0
    #allocation2 [shape = 'u8[131072]{0}', space=vmem, size = 0x20000, scoped, tag = 'input window, operand 0']
    #allocation3 [shape = 's32[2]{0}', space=sflag, size = 0x8, scoped, tag = 'scoped memory for tpu_custom_call.1']
    #allocation4 [shape = 's32[2]{0}', space=sflag, size = 0x8, scoped, tag = 'scoped memory for tpu_custom_call.1']
    #allocation5 [shape = 'u8[32768]{0}', space=vmem, size = 0x8000, scoped, tag = 'input window, operand 1, single buffered']
    #allocation6 [shape = 's32[1]{0}', space=sflag, size = 0x4, scoped, tag = 'scoped memory for tpu_custom_call.1']
    #allocation7 [shape = 'u8[512]{0}', space=vmem, size = 0x400, scoped, tag = 'output window, operand 0, single buffered']
    #allocation8 [shape = 'u8[512]{0}', space=vmem, size = 0x400, scoped, tag = 'output window, operand 1, single buffered']
    #allocation9 [shape = 's32[1]{0}', space=sflag, size = 0x4, scoped, tag = 'scoped memory for tpu_custom_call.1']
    %9 = vsyncpa [#allocation3], 0
    %s10 = scalar_lea.sflag [#allocation3], 1
    %11 = vsyncpa %s10, 0
    %12 = vsyncpa [#allocation6], 0
    %13 = vsyncpa [#allocation4], 0
    %14 = vsyncpa [#allocation9], 0
    loop: start=0, step=1, limit=4
    $region2: #{tpu_custom_call.1} parent=1 // loop_pre_header
      _
    $region3: #{tpu_custom_call.1} parent=1 // loop_header
      %s16 = sphi 0, %s20
      %p17 = scmp.ge.s32.totalorder %s16, 4
      %s26 = sphi 0, %s28
      %s29 = sphi 0, %s26
      %s30 = sphi 0, %s29
      %s46 = sphi 0, %s30
      %s50 = sphi 0, %s50
      %s52 = sphi 0, %s50
      %s53 = sphi 0, %s52
      %s67 = sphi 0, %s53
      %s71 = sphi 0, %s71
      %s73 = sphi 0, %s71
      %s74 = sphi 0, %s73
      %s88 = sphi 0, %s74
      %s92 = sphi 0, %s92
      %s94 = sphi 0, %s92
      %s95 = sphi 0, %s94
      %s109 = sphi 0, %s95
    $region4: #{tpu_custom_call.1} parent=1 // loop_header_branch
      %19 = sbr.rel (%p17) target = $region8
    $region5: #{tpu_custom_call.1} parent=1 // loop_body
      %s21 = ssub.s32 %s16, 1
      %s22 = ssub.s32 %s16, 2
      %s23 = sadd.s32 %s16, 1
      %s24 = ssub.s32 %s16, %s23
      %p25 = scmp.eq.s32.totalorder %s24, 0
      %s27 = sadd.s32 %s26, 1
      %s28 = scalar_select %p25, %s26, %s27
      %p31 = pneg %p25
      %p32 = scmp.eq.s32.totalorder %s16, 1
      %p33 = por %p31, %p32
      %p34 = scmp.ne.s32.totalorder %s26, %s29
      %p35 = scmp.eq.s32.totalorder %s16, 0
      %p36 = por %p34, %p35
      %p37 = scmp.ne.s32.totalorder %s26, %s29
      %p38 = scmp.eq.s32.totalorder %s21, 1
      %p39 = por %p37, %p38
      %p40 = scmp.ne.s32.totalorder %s29, %s30
      %p41 = scmp.eq.s32.totalorder %s21, 0
      %p42 = por %p40, %p41
      %p43 = scmp.ne.s32.totalorder %s29, %s30
      %p44 = scmp.eq.s32.totalorder %s22, 1
      %p45 = por %p43, %p44
      %p47 = scmp.ne.s32.totalorder %s30, %s46
      %p48 = scmp.eq.s32.totalorder %s22, 0
      %p49 = por %p47, %p48
      %s51 = sadd.s32 %s50, 1
      %p54 = scmp.eq.s32.totalorder %s16, 1
      %p55 = scmp.ne.s32.totalorder %s50, %s52
      %p56 = scmp.eq.s32.totalorder %s16, 0
      %p57 = por %p55, %p56
      %p58 = scmp.ne.s32.totalorder %s50, %s52
      %p59 = scmp.eq.s32.totalorder %s21, 1
      %p60 = por %p58, %p59
      %p61 = scmp.ne.s32.totalorder %s52, %s53
      %p62 = scmp.eq.s32.totalorder %s21, 0
      %p63 = por %p61, %p62
      %p64 = scmp.ne.s32.totalorder %s52, %s53
      %p65 = scmp.eq.s32.totalorder %s22, 1
      %p66 = por %p64, %p65
      %p68 = scmp.ne.s32.totalorder %s53, %s67
      %p69 = scmp.eq.s32.totalorder %s22, 0
      %p70 = por %p68, %p69
      %s72 = sadd.s32 %s71, 1
      %p75 = scmp.eq.s32.totalorder %s16, 1
      %p76 = scmp.ne.s32.totalorder %s71, %s73
      %p77 = scmp.eq.s32.totalorder %s16, 0
      %p78 = por %p76, %p77
      %p79 = scmp.ne.s32.totalorder %s71, %s73
      %p80 = scmp.eq.s32.totalorder %s21, 1
      %p81 = por %p79, %p80
      %p82 = scmp.ne.s32.totalorder %s73, %s74
      %p83 = scmp.eq.s32.totalorder %s21, 0
      %p84 = por %p82, %p83
      %p85 = scmp.ne.s32.totalorder %s73, %s74
      %p86 = scmp.eq.s32.totalorder %s22, 1
      %p87 = por %p85, %p86
      %p89 = scmp.ne.s32.totalorder %s74, %s88
      %p90 = scmp.eq.s32.totalorder %s22, 0
      %p91 = por %p89, %p90
      %s93 = sadd.s32 %s92, 1
      %p96 = scmp.eq.s32.totalorder %s16, 1
      %p97 = scmp.ne.s32.totalorder %s92, %s94
      %p98 = scmp.eq.s32.totalorder %s16, 0
      %p99 = por %p97, %p98
      %p100 = scmp.ne.s32.totalorder %s92, %s94
      %p101 = scmp.eq.s32.totalorder %s21, 1
      %p102 = por %p100, %p101
      %p103 = scmp.ne.s32.totalorder %s94, %s95
      %p104 = scmp.eq.s32.totalorder %s21, 0
      %p105 = por %p103, %p104
      %p106 = scmp.ne.s32.totalorder %s94, %s95
      %p107 = scmp.eq.s32.totalorder %s22, 1
      %p108 = por %p106, %p107
      %p110 = scmp.ne.s32.totalorder %s95, %s109
      %p111 = scmp.eq.s32.totalorder %s22, 0
      %p112 = por %p110, %p111
      %p113 = scmp.le.s32.totalorder 1, %s16
      %p114 = scmp.lt.s32.totalorder %s16, 3
      %p115 = pnand %p113, %p114
      %p116 = pneg %p115
      // Predicated region
      $region9: #{tpu_custom_call.1} parent=5 // pred_check
        _
      $region10: #{tpu_custom_call.1} parent=5 // pred_check_branch
        %118 = sbr.rel (%p115) target = $region12
      $region11: #{tpu_custom_call.1} parent=5 // pred_region
        %s119 = ssub.s32 %s16, 1
        // Predicated region
        $region13: #{tpu_custom_call.1} parent=11 // pred_check
          %p120 = pneg %p63
        $region14: #{tpu_custom_call.1} parent=11 // pred_check_branch
          %122 = sbr.rel (%p120) target = $region16
        $region15: #{tpu_custom_call.1} parent=11 // pred_region
          %s124 = ssub.s32 1024, 1024
          %125 = vsyncadd [#allocation6], %s124
          %s126 = sshll.u32 [#allocation5], 4
          %s127 = int_to_ptr.vmem [resolvable:$true] %s126
          %132 = dma.hbm_to_vmem [thread:$0]  %s1, 1024, %s127, [#allocation6], 64, 64, 4
        $region16: #{tpu_custom_call.1} parent=11 // pred_fallthru
          _
      $region12: #{tpu_custom_call.1} parent=5 // pred_fallthru
        _
      %p133 = scmp.lt.s32.totalorder %s16, 2
      // Predicated region
      $region17: #{tpu_custom_call.1} parent=5 // pred_check
        %p134 = pneg %p133
      $region18: #{tpu_custom_call.1} parent=5 // pred_check_branch
        %136 = sbr.rel (%p134) target = $region20
      $region19: #{tpu_custom_call.1} parent=5 // pred_region
        // Predicated region
        $region21: #{tpu_custom_call.1} parent=19 // pred_check
          %p137 = pneg %p36
        $region22: #{tpu_custom_call.1} parent=19 // pred_check_branch
          %139 = sbr.rel (%p137) target = $region24
        $region23: #{tpu_custom_call.1} parent=19 // pred_region
          %s140 = sand.u32 %s26, 1
          %s141 = scalar_lea.sflag [#allocation3], %s140
          %s142 = sand.u32 %s26, 1
          %s143 = smul.addr %s142, 128
          %s144 = scalar_lea.vmem [#allocation2], %s143
          %s145 = smul.u32 32, %s16
          %s147 = ssub.s32 2048, 2048
          %148 = vsyncadd %s141, %s147
          %s149 = smul.addr %s145, 64
          %s150 = scalar_lea.hbm %s0, %s149
          %s151 = sshll.u32 %s144, 4
          %s152 = int_to_ptr.vmem [resolvable:$true] %s151
          %157 = dma.hbm_to_vmem [thread:$0]  %s150, 2048, %s152, %s141, 64, 64, 4
        $region24: #{tpu_custom_call.1} parent=19 // pred_fallthru
          _
      $region20: #{tpu_custom_call.1} parent=5 // pred_fallthru
        _
      %p158 = scmp.le.s32.totalorder 1, %s16
      %p159 = scmp.lt.s32.totalorder %s16, 3
      %p160 = pnand %p158, %p159
      %p161 = pneg %p160
      // Predicated region
      $region25: #{tpu_custom_call.1} parent=5 // pred_check
        _
      $region26: #{tpu_custom_call.1} parent=5 // pred_check_branch
        %163 = sbr.rel (%p160) target = $region28
      $region27: #{tpu_custom_call.1} parent=5 // pred_region
        %s164 = ssub.s32 %s16, 1
        %s165 = sand.u32 %s29, 1
        %s166 = scalar_lea.sflag [#allocation3], %s165
        %s167 = sand.u32 %s29, 1
        %s168 = smul.addr %s167, 128
        %s169 = scalar_lea.vmem [#allocation2], %s168
        // Predicated region
        $region29: #{tpu_custom_call.1} parent=27 // pred_check
          %p170 = pneg %p42
        $region30: #{tpu_custom_call.1} parent=27 // pred_check_branch
          %172 = sbr.rel (%p170) target = $region32
        $region31: #{tpu_custom_call.1} parent=27 // pred_region
          %173 = dma.done %s166, 2048
        $region32: #{tpu_custom_call.1} parent=27 // pred_fallthru
          _
        // Predicated region
        $region33: #{tpu_custom_call.1} parent=27 // pred_check
          %p174 = pneg %p63
        $region34: #{tpu_custom_call.1} parent=27 // pred_check_branch
          %176 = sbr.rel (%p174) target = $region36
        $region35: #{tpu_custom_call.1} parent=27 // pred_region
          %177 = dma.done [#allocation6], 1024
        $region36: #{tpu_custom_call.1} parent=27 // pred_fallthru
          _
        %s178 = sand.u32 %s29, 1
        %s179 = scalar_lea.sflag [#allocation3], %s178
        %s180 = sand.u32 %s29, 1
        %s181 = smul.addr %s180, 128
        %s182 = scalar_lea.vmem [#allocation2], %s181
        %p183 = pneg %p42
        %p184 = pneg %p39
        %p185 = pneg %p63
        %p186 = pneg %p60
        %p187 = pneg %p84
        %p188 = pneg %p81
        %p189 = pneg %p105
        %p190 = pneg %p102
        %s191 = smul.u32 32, %s21
        %p193 = scmp.eq.s32.totalorder %s21, 0
        // Predicated region
        $region37: #{tpu_custom_call.1} parent=27 // pred_check
          %p194 = pneg %p193
        $region38: #{tpu_custom_call.1} parent=27 // pred_check_branch
          %196 = sbr.rel (%p194) target = $region40
        $region39: #{tpu_custom_call.1} parent=27 // pred_region
          %197 = vst [vmem:[#allocation7] sm:$0x1] 0.0
          %198 = vst [vmem:[#allocation8] sm:$0x1] 0.0
        $region40: #{tpu_custom_call.1} parent=27 // pred_fallthru
          _
        %v199 = vld [vmem:[%s169] sm:$0xf]
        %v200 = vld [vmem:[%s169 + $0x4] sm:$0xf]
        %v201 = vld [vmem:[%s169 + $0x8] sm:$0xf]
        %v202 = vld [vmem:[%s169 + $0xc] sm:$0xf]
        %v203 = vld [vmem:[%s169 + $0x10] sm:$0xf]
        %v204 = vld [vmem:[%s169 + $0x14] sm:$0xf]
        %v205 = vld [vmem:[%s169 + $0x18] sm:$0xf]
        %v206 = vld [vmem:[%s169 + $0x1c] sm:$0xf]
        %v207 = vld [vmem:[%s169 + $0x20] sm:$0xf]
        %v208 = vld [vmem:[%s169 + $0x24] sm:$0xf]
        %v209 = vld [vmem:[%s169 + $0x28] sm:$0xf]
        %v210 = vld [vmem:[%s169 + $0x2c] sm:$0xf]
        %v211 = vld [vmem:[%s169 + $0x30] sm:$0xf]
        %v212 = vld [vmem:[%s169 + $0x34] sm:$0xf]
        %v213 = vld [vmem:[%s169 + $0x38] sm:$0xf]
        %v214 = vld [vmem:[%s169 + $0x3c] sm:$0xf]
        %v215 = vld [vmem:[%s169 + $0x40] sm:$0xf]
        %v216 = vld [vmem:[%s169 + $0x44] sm:$0xf]
        %v217 = vld [vmem:[%s169 + $0x48] sm:$0xf]
        %v218 = vld [vmem:[%s169 + $0x4c] sm:$0xf]
        %v219 = vld [vmem:[%s169 + $0x50] sm:$0xf]
        %v220 = vld [vmem:[%s169 + $0x54] sm:$0xf]
        %v221 = vld [vmem:[%s169 + $0x58] sm:$0xf]
        %v222 = vld [vmem:[%s169 + $0x5c] sm:$0xf]
        %v223 = vld [vmem:[%s169 + $0x60] sm:$0xf]
        %v224 = vld [vmem:[%s169 + $0x64] sm:$0xf]
        %v225 = vld [vmem:[%s169 + $0x68] sm:$0xf]
        %v226 = vld [vmem:[%s169 + $0x6c] sm:$0xf]
        %v227 = vld [vmem:[%s169 + $0x70] sm:$0xf]
        %v228 = vld [vmem:[%s169 + $0x74] sm:$0xf]
        %v229 = vld [vmem:[%s169 + $0x78] sm:$0xf]
        %v230 = vld [vmem:[%s169 + $0x7c] sm:$0xf]
        %v231 = vld [vmem:[#allocation5] sm:$0xf]
        %v232 = vld [vmem:[#allocation5 + $0x4] sm:$0xf]
        %v233 = vld [vmem:[#allocation5 + $0x8] sm:$0xf]
        %v234 = vld [vmem:[#allocation5 + $0xc] sm:$0xf]
        %v235 = vld [vmem:[#allocation5 + $0x10] sm:$0xf]
        %v236 = vld [vmem:[#allocation5 + $0x14] sm:$0xf]
        %v237 = vld [vmem:[#allocation5 + $0x18] sm:$0xf]
        %v238 = vld [vmem:[#allocation5 + $0x1c] sm:$0xf]
        %v239 = vld [vmem:[#allocation5 + $0x20] sm:$0xf]
        %v240 = vld [vmem:[#allocation5 + $0x24] sm:$0xf]
        %v241 = vld [vmem:[#allocation5 + $0x28] sm:$0xf]
        %v242 = vld [vmem:[#allocation5 + $0x2c] sm:$0xf]
        %v243 = vld [vmem:[#allocation5 + $0x30] sm:$0xf]
        %v244 = vld [vmem:[#allocation5 + $0x34] sm:$0xf]
        %v245 = vld [vmem:[#allocation5 + $0x38] sm:$0xf]
        %v246 = vld [vmem:[#allocation5 + $0x3c] sm:$0xf]
        %v279 = vunpack.c.l.b16 %v199
        %v280 = vunpack.c.l.b16 %v200
        %v281 = vunpack.c.l.b16 %v201
        %v282 = vunpack.c.l.b16 %v202
        %v283 = vunpack.c.l.b16 %v203
        %v284 = vunpack.c.l.b16 %v204
        %v285 = vunpack.c.l.b16 %v205
        %v286 = vunpack.c.l.b16 %v206
        %v287 = vunpack.c.l.b16 %v207
        %v288 = vunpack.c.l.b16 %v208
        %v289 = vunpack.c.l.b16 %v209
        %v290 = vunpack.c.l.b16 %v210
        %v291 = vunpack.c.l.b16 %v211
        %v292 = vunpack.c.l.b16 %v212
        %v293 = vunpack.c.l.b16 %v213
        %v294 = vunpack.c.l.b16 %v214
        %v295 = vunpack.c.l.b16 %v215
        %v296 = vunpack.c.l.b16 %v216
        %v297 = vunpack.c.l.b16 %v217
        %v298 = vunpack.c.l.b16 %v218
        %v299 = vunpack.c.l.b16 %v219
        %v300 = vunpack.c.l.b16 %v220
        %v301 = vunpack.c.l.b16 %v221
        %v302 = vunpack.c.l.b16 %v222
        %v303 = vunpack.c.l.b16 %v223
        %v304 = vunpack.c.l.b16 %v224
        %v305 = vunpack.c.l.b16 %v225
        %v306 = vunpack.c.l.b16 %v226
        %v307 = vunpack.c.l.b16 %v227
        %v308 = vunpack.c.l.b16 %v228
        %v309 = vunpack.c.l.b16 %v229
        %v310 = vunpack.c.l.b16 %v230
        %v311 = vpack.c.b16 %v280, %v279
        %v312 = vpack.c.b16 %v282, %v281
        %v313 = vpack.c.b16 %v284, %v283
        %v314 = vpack.c.b16 %v286, %v285
        %v315 = vpack.c.b16 %v288, %v287
        %v316 = vpack.c.b16 %v290, %v289
        %v317 = vpack.c.b16 %v292, %v291
        %v318 = vpack.c.b16 %v294, %v293
        %v319 = vpack.c.b16 %v296, %v295
        %v320 = vpack.c.b16 %v298, %v297
        %v321 = vpack.c.b16 %v300, %v299
        %v322 = vpack.c.b16 %v302, %v301
        %v323 = vpack.c.b16 %v304, %v303
        %v324 = vpack.c.b16 %v306, %v305
        %v325 = vpack.c.b16 %v308, %v307
        %v326 = vpack.c.b16 %v310, %v309
        %v359 = vunpack.c.l.b16 %v231
        %v360 = vunpack.c.l.b16 %v232
        %v361 = vunpack.c.l.b16 %v233
        %v362 = vunpack.c.l.b16 %v234
        %v363 = vunpack.c.l.b16 %v235
        %v364 = vunpack.c.l.b16 %v236
        %v365 = vunpack.c.l.b16 %v237
        %v366 = vunpack.c.l.b16 %v238
        %v367 = vunpack.c.l.b16 %v239
        %v368 = vunpack.c.l.b16 %v240
        %v369 = vunpack.c.l.b16 %v241
        %v370 = vunpack.c.l.b16 %v242
        %v371 = vunpack.c.l.b16 %v243
        %v372 = vunpack.c.l.b16 %v244
        %v373 = vunpack.c.l.b16 %v245
        %v374 = vunpack.c.l.b16 %v246
        %v375 = vpack.c.b16 %v360, %v359
        %v376 = vpack.c.b16 %v362, %v361
        %v377 = vpack.c.b16 %v364, %v363
        %v378 = vpack.c.b16 %v366, %v365
        %v379 = vpack.c.b16 %v368, %v367
        %v380 = vpack.c.b16 %v370, %v369
        %v381 = vpack.c.b16 %v372, %v371
        %v382 = vpack.c.b16 %v374, %v373
        %391 = vmatprep.subr.bf16.mxu0 0
        %392 = vmatpush1.bf16.msra.mxu0 %v375
        %393 = vmatprep.subr.bf16.mxu0 0
        %394 = vmatpush1.bf16.msra.mxu0 %v376
        %395 = vmatprep.subr.bf16.mxu0 0
        %396 = vmatpush1.bf16.msra.mxu0 %v377
        %397 = vmatprep.subr.bf16.mxu0 0
        %398 = vmatpush1.bf16.msra.mxu0 %v378
        %399 = vmatprep.subr.bf16.mxu0 0
        %400 = vmatpush1.bf16.msra.mxu0 %v379
        %401 = vmatprep.subr.bf16.mxu0 0
        %402 = vmatpush1.bf16.msra.mxu0 %v380
        %403 = vmatprep.subr.bf16.mxu0 0
        %404 = vmatpush1.bf16.msra.mxu0 %v381
        %405 = vmatprep.subr.bf16.mxu0 0
        %406 = vmatpush1.bf16.msra.mxu0 %v382
        %407 = vmatprep.subr.bf16.mxu0 0
        %408 = vmatpush1.bf16.msra.mxu0 0
        %409 = vmatprep.subr.bf16.mxu0 0
        %410 = vmatpush1.bf16.msra.mxu0 0
        %411 = vmatprep.subr.bf16.mxu0 0
        %412 = vmatpush1.bf16.msra.mxu0 0
        %413 = vmatprep.subr.bf16.mxu0 0
        %414 = vmatpush1.bf16.msra.mxu0 0
        %415 = vmatprep.subr.bf16.mxu0 0
        %416 = vmatpush1.bf16.msra.mxu0 0
        %417 = vmatprep.subr.bf16.mxu0 0
        %418 = vmatpush1.bf16.msra.mxu0 0
        %419 = vmatprep.subr.bf16.mxu0 0
        %420 = vmatpush1.bf16.msra.mxu0 0
        %421 = vmatprep.subr.bf16.mxu0 0
        %422 = vmatpush1.bf16.msra.mxu0 0
        %423 = vmatprep.mubr.bf16.mxu0 0
        %424 = vmatmul.mubr.bf16.gmra.mrb[0].mxu0 %v311
        %v425 = vpop.f32.mrb[0].mxu0
        %v426 = vadd.f32 0.0, %v425
        %v427 = vpop.f32.mrb[0].mxu0
        %v428 = vpop.f32.mrb[0].mxu0
        %v429 = vadd.f32 0.0, %v428
        %v430 = vpop.f32.mrb[0].mxu0
        %431 = vmatprep.mubr.bf16.mxu0 0
        %432 = vmatmul.mubr.bf16.gmra.mrb[0].mxu0 %v312
        %v433 = vpop.f32.mrb[0].mxu0
        %v434 = vadd.f32 0.0, %v433
        %v435 = vpop.f32.mrb[0].mxu0
        %v436 = vpop.f32.mrb[0].mxu0
        %v437 = vadd.f32 0.0, %v436
        %v438 = vpop.f32.mrb[0].mxu0
        %439 = vmatprep.mubr.bf16.mxu0 0
        %440 = vmatmul.mubr.bf16.gmra.mrb[0].mxu0 %v313
        %v441 = vpop.f32.mrb[0].mxu0
        %v442 = vadd.f32 0.0, %v441
        %v443 = vpop.f32.mrb[0].mxu0
        %v444 = vpop.f32.mrb[0].mxu0
        %v445 = vadd.f32 0.0, %v444
        %v446 = vpop.f32.mrb[0].mxu0
        %447 = vmatprep.mubr.bf16.mxu0 0
        %448 = vmatmul.mubr.bf16.gmra.mrb[0].mxu0 %v314
        %v449 = vpop.f32.mrb[0].mxu0
        %v450 = vadd.f32 0.0, %v449
        %v451 = vpop.f32.mrb[0].mxu0
        %v452 = vpop.f32.mrb[0].mxu0
        %v453 = vadd.f32 0.0, %v452
        %v454 = vpop.f32.mrb[0].mxu0
        %455 = vmatprep.mubr.bf16.mxu0 0
        %456 = vmatmul.mubr.bf16.gmra.mrb[0].mxu0 %v315
        %v457 = vpop.f32.mrb[0].mxu0
        %v458 = vadd.f32 0.0, %v457
        %v459 = vpop.f32.mrb[0].mxu0
        %v460 = vpop.f32.mrb[0].mxu0
        %v461 = vadd.f32 0.0, %v460
        %v462 = vpop.f32.mrb[0].mxu0
        %463 = vmatprep.mubr.bf16.mxu0 0
        %464 = vmatmul.mubr.bf16.gmra.mrb[0].mxu0 %v316
        %v465 = vpop.f32.mrb[0].mxu0
        %v466 = vadd.f32 0.0, %v465
        %v467 = vpop.f32.mrb[0].mxu0
        %v468 = vpop.f32.mrb[0].mxu0
        %v469 = vadd.f32 0.0, %v468
        %v470 = vpop.f32.mrb[0].mxu0
        %471 = vmatprep.mubr.bf16.mxu0 0
        %472 = vmatmul.mubr.bf16.gmra.mrb[0].mxu0 %v317
        %v473 = vpop.f32.mrb[0].mxu0
        %v474 = vadd.f32 0.0, %v473
        %v475 = vpop.f32.mrb[0].mxu0
        %v476 = vpop.f32.mrb[0].mxu0
        %v477 = vadd.f32 0.0, %v476
        %v478 = vpop.f32.mrb[0].mxu0
        %479 = vmatprep.mubr.bf16.mxu0 0
        %480 = vmatmul.mubr.bf16.gmra.mrb[0].mxu0 %v318
        %v481 = vpop.f32.mrb[0].mxu0
        %v482 = vadd.f32 0.0, %v481
        %v483 = vpop.f32.mrb[0].mxu0
        %v484 = vpop.f32.mrb[0].mxu0
        %v485 = vadd.f32 0.0, %v484
        %v486 = vpop.f32.mrb[0].mxu0
        %487 = vmatprep.mubr.bf16.mxu0 0
        %488 = vmatmul.mubr.bf16.gmra.mrb[0].mxu0 %v319
        %v489 = vpop.f32.mrb[0].mxu0
        %v490 = vadd.f32 0.0, %v489
        %v491 = vpop.f32.mrb[0].mxu0
        %v492 = vpop.f32.mrb[0].mxu0
        %v493 = vadd.f32 0.0, %v492
        %v494 = vpop.f32.mrb[0].mxu0
        %495 = vmatprep.mubr.bf16.mxu0 0
        %496 = vmatmul.mubr.bf16.gmra.mrb[0].mxu0 %v320
        %v497 = vpop.f32.mrb[0].mxu0
        %v498 = vadd.f32 0.0, %v497
        %v499 = vpop.f32.mrb[0].mxu0
        %v500 = vpop.f32.mrb[0].mxu0
        %v501 = vadd.f32 0.0, %v500
        %v502 = vpop.f32.mrb[0].mxu0
        %503 = vmatprep.mubr.bf16.mxu0 0
        %504 = vmatmul.mubr.bf16.gmra.mrb[0].mxu0 %v321
        %v505 = vpop.f32.mrb[0].mxu0
        %v506 = vadd.f32 0.0, %v505
        %v507 = vpop.f32.mrb[0].mxu0
        %v508 = vpop.f32.mrb[0].mxu0
        %v509 = vadd.f32 0.0, %v508
        %v510 = vpop.f32.mrb[0].mxu0
        %511 = vmatprep.mubr.bf16.mxu0 0
        %512 = vmatmul.mubr.bf16.gmra.mrb[0].mxu0 %v322
        %v513 = vpop.f32.mrb[0].mxu0
        %v514 = vadd.f32 0.0, %v513
        %v515 = vpop.f32.mrb[0].mxu0
        %v516 = vpop.f32.mrb[0].mxu0
        %v517 = vadd.f32 0.0, %v516
        %v518 = vpop.f32.mrb[0].mxu0
        %519 = vmatprep.mubr.bf16.mxu0 0
        %520 = vmatmul.mubr.bf16.gmra.mrb[0].mxu0 %v323
        %v521 = vpop.f32.mrb[0].mxu0
        %v522 = vadd.f32 0.0, %v521
        %v523 = vpop.f32.mrb[0].mxu0
        %v524 = vpop.f32.mrb[0].mxu0
        %v525 = vadd.f32 0.0, %v524
        %v526 = vpop.f32.mrb[0].mxu0
        %527 = vmatprep.mubr.bf16.mxu0 0
        %528 = vmatmul.mubr.bf16.gmra.mrb[0].mxu0 %v324
        %v529 = vpop.f32.mrb[0].mxu0
        %v530 = vadd.f32 0.0, %v529
        %v531 = vpop.f32.mrb[0].mxu0
        %v532 = vpop.f32.mrb[0].mxu0
        %v533 = vadd.f32 0.0, %v532
        %v534 = vpop.f32.mrb[0].mxu0
        %535 = vmatprep.mubr.bf16.mxu0 0
        %536 = vmatmul.mubr.bf16.gmra.mrb[0].mxu0 %v325
        %v537 = vpop.f32.mrb[0].mxu0
        %v538 = vadd.f32 0.0, %v537
        %v539 = vpop.f32.mrb[0].mxu0
        %v540 = vpop.f32.mrb[0].mxu0
        %v541 = vadd.f32 0.0, %v540
        %v542 = vpop.f32.mrb[0].mxu0
        %543 = vmatprep.mubr.bf16.mxu0 0
        %544 = vmatmul.mubr.bf16.gmra.mrb[0].mxu0 %v326
        %v545 = vpop.f32.mrb[0].mxu0
        %v546 = vadd.f32 0.0, %v545
        %v547 = vpop.f32.mrb[0].mxu0
        %v548 = vpop.f32.mrb[0].mxu0
        %v549 = vadd.f32 0.0, %v548
        %v550 = vpop.f32.mrb[0].mxu0
        %551 = vdwg.mxu0
        %v552 = vld [vmem:[#allocation7] sm:$0x1]
        %v553 = vadd.f32 %v426, %v429
        %v554 = vadd.f32 %v553, %v434
        %v555 = vadd.f32 %v554, %v437
        %v556 = vadd.f32 %v555, %v442
        %v557 = vadd.f32 %v556, %v445
        %v558 = vadd.f32 %v557, %v450
        %v559 = vadd.f32 %v558, %v453
        %v560 = vadd.f32 %v559, %v458
        %v561 = vadd.f32 %v560, %v461
        %v562 = vadd.f32 %v561, %v466
        %v563 = vadd.f32 %v562, %v469
        %v564 = vadd.f32 %v563, %v474
        %v565 = vadd.f32 %v564, %v477
        %v566 = vadd.f32 %v565, %v482
        %v567 = vadd.f32 %v566, %v485
        %v568 = vadd.f32 %v567, %v490
        %v569 = vadd.f32 %v568, %v493
        %v570 = vadd.f32 %v569, %v498
        %v571 = vadd.f32 %v570, %v501
        %v572 = vadd.f32 %v571, %v506
        %v573 = vadd.f32 %v572, %v509
        %v574 = vadd.f32 %v573, %v514
        %v575 = vadd.f32 %v574, %v517
        %v576 = vadd.f32 %v575, %v522
        %v577 = vadd.f32 %v576, %v525
        %v578 = vadd.f32 %v577, %v530
        %v579 = vadd.f32 %v578, %v533
        %v580 = vadd.f32 %v579, %v538
        %v581 = vadd.f32 %v580, %v541
        %v582 = vadd.f32 %v581, %v546
        %v583 = vadd.f32 %v582, %v549
        %v584 = vrot.slane %v583, 4
        %v585 = vadd.f32 %v583, %v584
        %v586 = vrot.slane %v585, 2
        %v587 = vadd.f32 %v585, %v586
        %v588 = vrot.slane %v587, 1
        %v589 = vadd.f32 %v587, %v588
        %v590 = vadd.f32 %v552, %v589
        %591 = vst [vmem:[#allocation7] sm:$0x1] %v590
        %v592 = vld [vmem:[#allocation8] sm:$0x1]
        %v593 = vmul.f32 %v426, %v426
        %v594 = vmul.f32 %v429, %v429
        %v595 = vmul.f32 %v434, %v434
        %v596 = vmul.f32 %v437, %v437
        %v597 = vmul.f32 %v442, %v442
        %v598 = vmul.f32 %v445, %v445
        %v599 = vmul.f32 %v450, %v450
        %v600 = vmul.f32 %v453, %v453
        %v601 = vmul.f32 %v458, %v458
        %v602 = vmul.f32 %v461, %v461
        %v603 = vmul.f32 %v466, %v466
        %v604 = vmul.f32 %v469, %v469
        %v605 = vmul.f32 %v474, %v474
        %v606 = vmul.f32 %v477, %v477
        %v607 = vmul.f32 %v482, %v482
        %v608 = vmul.f32 %v485, %v485
        %v609 = vmul.f32 %v490, %v490
        %v610 = vmul.f32 %v493, %v493
        %v611 = vmul.f32 %v498, %v498
        %v612 = vmul.f32 %v501, %v501
        %v613 = vmul.f32 %v506, %v506
        %v614 = vmul.f32 %v509, %v509
        %v615 = vmul.f32 %v514, %v514
        %v616 = vmul.f32 %v517, %v517
        %v617 = vmul.f32 %v522, %v522
        %v618 = vmul.f32 %v525, %v525
        %v619 = vmul.f32 %v530, %v530
        %v620 = vmul.f32 %v533, %v533
        %v621 = vmul.f32 %v538, %v538
        %v622 = vmul.f32 %v541, %v541
        %v623 = vmul.f32 %v546, %v546
        %v624 = vmul.f32 %v549, %v549
        %v625 = vadd.f32 %v593, %v594
        %v626 = vadd.f32 %v625, %v595
        %v627 = vadd.f32 %v626, %v596
        %v628 = vadd.f32 %v627, %v597
        %v629 = vadd.f32 %v628, %v598
        %v630 = vadd.f32 %v629, %v599
        %v631 = vadd.f32 %v630, %v600
        %v632 = vadd.f32 %v631, %v601
        %v633 = vadd.f32 %v632, %v602
        %v634 = vadd.f32 %v633, %v603
        %v635 = vadd.f32 %v634, %v604
        %v636 = vadd.f32 %v635, %v605
        %v637 = vadd.f32 %v636, %v606
        %v638 = vadd.f32 %v637, %v607
        %v639 = vadd.f32 %v638, %v608
        %v640 = vadd.f32 %v639, %v609
        %v641 = vadd.f32 %v640, %v610
        %v642 = vadd.f32 %v641, %v611
        %v643 = vadd.f32 %v642, %v612
        %v644 = vadd.f32 %v643, %v613
        %v645 = vadd.f32 %v644, %v614
        %v646 = vadd.f32 %v645, %v615
        %v647 = vadd.f32 %v646, %v616
        %v648 = vadd.f32 %v647, %v617
        %v649 = vadd.f32 %v648, %v618
        %v650 = vadd.f32 %v649, %v619
        %v651 = vadd.f32 %v650, %v620
        %v652 = vadd.f32 %v651, %v621
        %v653 = vadd.f32 %v652, %v622
        %v654 = vadd.f32 %v653, %v623
        %v655 = vadd.f32 %v654, %v624
        %v656 = vrot.slane %v655, 4
        %v657 = vadd.f32 %v655, %v656
        %v658 = vrot.slane %v657, 2
        %v659 = vadd.f32 %v657, %v658
        %v660 = vrot.slane %v659, 1
        %v661 = vadd.f32 %v659, %v660
        %v662 = vadd.f32 %v592, %v661
        %663 = vst [vmem:[#allocation8] sm:$0x1] %v662
        // Predicated region
        $region41: #{tpu_custom_call.1} parent=27 // pred_check
          %p664 = pneg %p81
        $region42: #{tpu_custom_call.1} parent=27 // pred_check_branch
          %666 = sbr.rel (%p664) target = $region44
        $region43: #{tpu_custom_call.1} parent=27 // pred_region
          %s668 = ssub.s32 16, 16
          %669 = vsyncadd [#allocation4], %s668
          %s671 = sshll.u32 [#allocation7], 4
          %s672 = int_to_ptr.vmem [resolvable:$true] %s671
          %674 = dma.vmem_to_hbm [thread:$0]  %s672, 16, %s2, [#allocation4]
        $region44: #{tpu_custom_call.1} parent=27 // pred_fallthru
          _
        // Predicated region
        $region45: #{tpu_custom_call.1} parent=27 // pred_check
          %p675 = pneg %p102
        $region46: #{tpu_custom_call.1} parent=27 // pred_check_branch
          %677 = sbr.rel (%p675) target = $region48
        $region47: #{tpu_custom_call.1} parent=27 // pred_region
          %s679 = ssub.s32 16, 16
          %680 = vsyncadd [#allocation9], %s679
          %s682 = sshll.u32 [#allocation8], 4
          %s683 = int_to_ptr.vmem [resolvable:$true] %s682
          %685 = dma.vmem_to_hbm [thread:$0]  %s683, 16, %s3, [#allocation9]
        $region48: #{tpu_custom_call.1} parent=27 // pred_fallthru
          _
        // Predicated region
        $region49: #{tpu_custom_call.1} parent=27 // pred_check
          %p686 = pneg %p81
        $region50: #{tpu_custom_call.1} parent=27 // pred_check_branch
          %688 = sbr.rel (%p686) target = $region52
        $region51: #{tpu_custom_call.1} parent=27 // pred_region
          %689 = dma.done [#allocation4], 16
        $region52: #{tpu_custom_call.1} parent=27 // pred_fallthru
          _
        // Predicated region
        $region53: #{tpu_custom_call.1} parent=27 // pred_check
          %p690 = pneg %p102
        $region54: #{tpu_custom_call.1} parent=27 // pred_check_branch
          %692 = sbr.rel (%p690) target = $region56
        $region55: #{tpu_custom_call.1} parent=27 // pred_region
          %693 = dma.done [#allocation9], 16
        $region56: #{tpu_custom_call.1} parent=27 // pred_fallthru
          _
      $region28: #{tpu_custom_call.1} parent=5 // pred_fallthru
        _
      %p694 = scmp.le.s32.totalorder 2, %s16
      // Predicated region
      $region57: #{tpu_custom_call.1} parent=5 // pred_check
        %p695 = pneg %p694
      $region58: #{tpu_custom_call.1} parent=5 // pred_check_branch
        %697 = sbr.rel (%p695) target = $region60
      $region59: #{tpu_custom_call.1} parent=5 // pred_region
        %s698 = ssub.s32 %s16, 2
      $region60: #{tpu_custom_call.1} parent=5 // pred_fallthru
        _
    $region6: #{tpu_custom_call.1} parent=1 // loop_footer
      %s20 = sadd.s32 1, %s16
    $region7: #{tpu_custom_call.1} parent=1 // loop_footer_branch
      %15 = sbr.rel target = $region3
    $region8: #{tpu_custom_call.1} parent=1 // loop_exit
      _
    %699 = vsyncpa [#allocation3], 1
    %s700 = scalar_lea.sflag [#allocation3], 1
    %701 = vsyncpa %s700, 1
    %702 = vsyncpa [#allocation6], 1
    %703 = vsyncpa [#allocation4], 1
    %s704 = scalar_lea.sflag [#allocation4], 1
    %705 = vsyncpa %s704, 1
    %706 = vsyncpa [#allocation9], 1

</llo_original>
